<compile_context>
chip_gen: v6e
topology: v6e:2x2x1
jax: 0.10.0
libtpu: 0.0.40
codegen_flags: <defaults>
</compile_context>

<pallas_src>
import jax
import jax.numpy as jnp
import numpy as np
from jax.experimental import pallas as pl
from jax.experimental.pallas import tpu as pltpu


def _round_up(a, m):
    return ((a + m - 1) // m) * m


def tasksim_kernel(x_ref, wt_ref, b_ref, o_ref):
    # Fused masked linear layer.  Mask is pre-folded into wt / b, so the kernel
    # is a single MXU contraction (f32 accumulation) plus a bias row add.
    #   x_ref : (bm, D)   native dtype (bf16 ok, fed straight to the MXU)
    #   wt_ref: (D, tn)   pre-transposed, lane-padded, mask-folded weight
    #   b_ref : (1, tn)   f32 bias*mask row (broadcasts over the bm rows)
    logits = jax.lax.dot_general(
        x_ref[...], wt_ref[...],
        (((1,), (0,)), ((), ())),              # (bm, D) @ (D, tn)
        preferred_element_type=jnp.float32,
    )
    o_ref[...] = (logits + b_ref[...]).astype(o_ref.dtype)


def tasksim_forward(x, w, b, y, *, block_b=512, block_c=256,
                    out_dtype=jnp.float32):
    """x: (B, D) features, w: (C, D), b: (C,), y: (B,) int labels -> (B, C).

    Matches TasksimModel.forward in the frozen-features / training / masking
    branch: F.linear(x, w, b) masked by the set of classes present in y.
    Note: `w` must be the *effective* classifier weight (WeightNorm_Classifier
    stores it directly as a plain parameter, so that is just `classifier.weight`).
    """
    B, D = x.shape
    C = w.shape[0]

    # ---- head (class) tiling: lane-dense, 256-wide tiles for large heads ----
    tn = 128 if C <= 128 else min(_round_up(block_c, 128), 256 * pl.cdiv(block_c, 256))
    tn = min(tn, 256) if C > 128 else 128
    C_pad = _round_up(C, tn)
    nc = C_pad // tn

    # ---- class-presence mask over the FULL batch (== eye(C)[y.unique()].sum(0)),
    # computed in the wrapper so batch tiling cannot change semantics. ----
    cls = jnp.arange(C_pad, dtype=jnp.int32)
    mask_f = (cls[None, :] == y.astype(jnp.int32)[:, None]).any(axis=0)
    mask_f = mask_f.astype(jnp.float32)                               # (C_pad,)

    # ---- fold mask into weight and bias:  (x@W^T + b)*m == x@(W*m)^T + b*m ----
    wt = jnp.zeros((D, C_pad), dtype=w.dtype).at[:, :C].set(w.T)
    wt = wt * mask_f[None, :].astype(w.dtype)        # 0/1 mask: exact in any dtype
    b_row = jnp.zeros((1, C_pad), jnp.float32).at[0, :C].set(b.astype(jnp.float32))
    b_row = b_row * mask_f[None, :]

    # ---- batch tiling: big tiles, sublane-aligned, >=2 steps once B is large ----
    sub = 16 if x.dtype == jnp.bfloat16 else 8       # sublane packing for bm
    B_sub = _round_up(B, sub)
    nb = pl.cdiv(B_sub, block_b)
    if nb == 1 and B >= 256:
        nb = 2                                       # keep both v7x TCs busy
    bm = _round_up(pl.cdiv(B_sub, nb), sub)
    B_pad = bm * nb
    if B_pad != B:
        x = jnp.pad(x, ((0, B_pad - B), (0, 0)))     # zero rows, sliced off below

    # ---- VMEM accounting: single-buffer the grid-invariant weight when large,
    # raise the scoped-VMEM limit only if the working set needs it. ----
    xb = x.dtype.itemsize
    wb = wt.dtype.itemsize
    ob = jnp.dtype(out_dtype).itemsize
    single_w = (nc == 1) and (D * tn * wb >= (1 << 20))
    w_buffers = 1 if single_w else 2
    est = (2 * bm * D * xb              # double-buffered activations
           + w_buffers * D * tn * wb    # weight tile(s)
           + 2 * tn * 4                 # bias row
           + 2 * bm * tn * ob)          # double-buffered output tile
    cp_kwargs = dict(dimension_semantics=("parallel", "parallel"))
    if est > 24 * 1024 * 1024:
        cp_kwargs["vmem_limit_bytes"] = min(int(est * 1.5), 100 * 1024 * 1024)

    w_spec_kwargs = {"pipeline_mode": pl.Buffered(1)} if single_w else {}
    in_specs = [
        pl.BlockSpec((bm, D), lambda i, j: (i, 0)),              # activations
        pl.BlockSpec((D, tn), lambda i, j: (0, j), **w_spec_kwargs),  # weight
        pl.BlockSpec((1, tn), lambda i, j: (0, j)),              # bias*mask row
    ]

    out = pl.pallas_call(
        tasksim_kernel,
        out_shape=jax.ShapeDtypeStruct((B_pad, C_pad), out_dtype),
        grid=(nb, nc),
        in_specs=in_specs,
        out_specs=pl.BlockSpec((bm, tn), lambda i, j: (i, j)),
        compiler_params=pltpu.CompilerParams(**cp_kwargs),
    )(x, wt, b_row)

    return out[:B, :C]                                # drop batch / lane padding


if __name__ == "__main__":
    # Small shapes consistent with the module: batch=8, fc_in_features=128,
    # head_size=16 (WeightNorm_Classifier after extend_head).
    B, D, C = 8, 128, 16

    key = jax.random.PRNGKey(0)
    kx, kw, kb, ky = jax.random.split(key, 4)

    # bf16 activations / weights go straight into the MXU (f32 accumulation).
    x = jax.random.normal(kx, (B, D), dtype=jnp.float32).astype(jnp.bfloat16)
    # WeightNorm_Classifier.init_weights: kaiming_normal_ weight; bias starts at
    # zero but becomes nonzero during training -- use random bias to exercise it.
    w = (jax.random.normal(kw, (C, D), dtype=jnp.float32)
         * jnp.sqrt(2.0 / D)).astype(jnp.bfloat16)
    b = 0.1 * jax.random.normal(kb, (C,), dtype=jnp.float32)
    y = jax.random.randint(ky, (B,), 0, C)            # labels

    out = jax.block_until_ready(tasksim_forward(x, w, b, y))

    # Host-side reference (bf16 values are exactly representable in f32).
    x32 = np.asarray(x, dtype=np.float32)
    w32 = np.asarray(w, dtype=np.float32)
    ref_logits = x32 @ w32.T + np.asarray(b)
    y_np = np.asarray(y)
    ref_mask = (np.arange(C)[None, :] == y_np[:, None]).any(axis=0).astype(np.float32)
    ref = ref_logits * ref_mask[None, :]

    assert out.shape == (B, C) and out.dtype == jnp.float32
    np.testing.assert_allclose(np.asarray(out), ref, rtol=1e-4, atol=1e-4)
    print("KERNEL_OK")
</pallas_src>

<mosaic_0001>
module attributes {stable_mosaic.version = 11 : i64} {
  func.func @tasksim_kernel(%arg0: i32, %arg1: i32, %arg2: memref<16x128xbf16, #tpu.memory_space<vmem>>, %arg3: memref<128x128xbf16, #tpu.memory_space<vmem>>, %arg4: memref<1x128xf32, #tpu.memory_space<vmem>>, %arg5: memref<16x128xf32, #tpu.memory_space<vmem>>) attributes {dimension_semantics = [#tpu.dimension_semantics<parallel>, #tpu.dimension_semantics<parallel>], iteration_bounds = array<i64: 1, 1>, scalar_prefetch = 0 : i64, scratch_operands = 0 : i64, tpu.core_type = #tpu.core_type<tc>, window_params = [{transform_indices = @transform_0, window_bounds = array<i64: 16, 128>}, {transform_indices = @transform_1, window_bounds = array<i64: 128, 128>}, {transform_indices = @transform_2, window_bounds = array<i64: 1, 128>}, {transform_indices = @transform_3, window_bounds = array<i64: 16, 128>}]} {
    %c0 = arith.constant 0 : index
    %c0_0 = arith.constant 0 : index
    %0 = vector.load %arg2[%c0, %c0_0] : memref<16x128xbf16, #tpu.memory_space<vmem>>, vector<16x128xbf16>
    %c0_1 = arith.constant 0 : index
    %c0_2 = arith.constant 0 : index
    %1 = vector.load %arg3[%c0_1, %c0_2] : memref<128x128xbf16, #tpu.memory_space<vmem>>, vector<128x128xbf16>
    %cst = arith.constant dense<0.000000e+00> : vector<16x128xf32>
    %2 = tpu.matmul %0, %1, %cst {dimension_numbers = #tpu.dot_dimension_numbers<[1], [0], [0], [1], [0, 0, 1, 1], [], []>} : vector<16x128xbf16>, vector<128x128xbf16>, vector<16x128xf32> -> vector<16x128xf32>
    %c0_3 = arith.constant 0 : index
    %c0_4 = arith.constant 0 : index
    %3 = vector.load %arg4[%c0_3, %c0_4] : memref<1x128xf32, #tpu.memory_space<vmem>>, vector<1x128xf32>
    %4 = vector.broadcast %3 : vector<1x128xf32> to vector<16x128xf32>
    %5 = arith.addf %2, %4 : vector<16x128xf32>
    %c0_5 = arith.constant 0 : index
    %c0_6 = arith.constant 0 : index
    %6 = vector.load %arg5[%c0_5, %c0_6] : memref<16x128xf32, #tpu.memory_space<vmem>>, vector<16x128xf32>
    tpu.vector_store %arg5[%c0_5, %c0_6], %5 {strides = array<i32>} : memref<16x128xf32, #tpu.memory_space<vmem>>, vector<16x128xf32>,
    return
  }
  func.func @transform_0(%arg0: i32, %arg1: i32) -> (i32, i32) {
    %c0_i32 = arith.constant 0 : i32
    %c0_i32_0 = arith.constant 0 : i32
    return %arg0, %c0_i32 : i32, i32
  }
  func.func @transform_1(%arg0: i32, %arg1: i32) -> (i32, i32) {
    %c0_i32 = arith.constant 0 : i32
    %c0_i32_0 = arith.constant 0 : i32
    return %c0_i32, %arg1 : i32, i32
  }
  func.func @transform_2(%arg0: i32, %arg1: i32) -> (i32, i32) {
    %c0_i32 = arith.constant 0 : i32
    %c0_i32_0 = arith.constant 0 : i32
    return %c0_i32, %arg1 : i32, i32
  }
  func.func @transform_3(%arg0: i32, %arg1: i32) -> (i32, i32) {
    %c0_i32 = arith.constant 0 : i32
    return %arg0, %arg1 : i32, i32
  }
}

</mosaic_0001>

<llo_original>
// kernel: tpu_custom_call.1
$region0: #{tpu_custom_call.1}
  #allocation0 [shape = 'u32[]', space=smem, size = 0x4, offset = 0x4, fixed_abs, tag = 'smem constant byte address 0x4 - core index']
  #allocation1 [shape = 'u32[144,128]{1,0:T(1,128)}', space=vmem, size = 0x12000, scoped, tag = 'internal scratch']
  %s0 = inlined_call_operand.hbm [shape: bf16[16,128], index: 0, kind: input, shape index: {}]
  %s1 = inlined_call_operand.hbm [shape: bf16[128,128], index: 1, kind: input, shape index: {}]
  %s2 = inlined_call_operand.vmem [shape: f32[1,128], index: 2, kind: input, shape index: {}]
  %s3 = inlined_call_operand.hbm [shape: f32[16,128], index: 3, kind: output, shape index: {}]
  %s4 = sld [smem:[#allocation0]]
  $region30: #{tpu_custom_call.1} parent=0
    _
  %s6 = ssub.s32 1, %s4
  %s7 = scalar_select 0, %s6, %s4
  $region1: #{tpu_custom_call.1} parent=0
    #allocation2 [shape = 'u8[4096]{0}', space=vmem, size = 0x1000, scoped, tag = 'input window, operand 0, single buffered']
    #allocation3 [shape = 's32[1]{0}', space=sflag, size = 0x4, scoped, tag = 'scoped memory for tpu_custom_call.1']
    #allocation4 [shape = 's32[1]{0}', space=sflag, size = 0x4, scoped, tag = 'scoped memory for tpu_custom_call.1']
    #allocation5 [shape = 'u8[32768]{0}', space=vmem, size = 0x8000, scoped, tag = 'input window, operand 1, single buffered']
    #allocation6 [shape = 's32[1]{0}', space=sflag, size = 0x4, scoped, tag = 'scoped memory for tpu_custom_call.1']
    #allocation7 [shape = 'u8[8192]{0}', space=vmem, size = 0x2000, scoped, tag = 'output window, operand 0, single buffered']
    %8 = vsyncpa [#allocation3], 0
    %9 = vsyncpa [#allocation6], 0
    %10 = vsyncpa [#allocation4], 0
    // Predicated region
    $region2: #{tpu_custom_call.1} parent=1 // pred_check
      _
    $region3: #{tpu_custom_call.1} parent=1 // pred_check_branch
      %12 = sbr.rel (0) target = $region5
    $region4: #{tpu_custom_call.1} parent=1 // pred_region
      %s14 = ssub.s32 128, 128
      %15 = vsyncadd [#allocation3], %s14
      %s16 = sshll.u32 [#allocation2], 4
      %s17 = int_to_ptr.vmem [resolvable:$true] %s16
      %22 = dma.hbm_to_vmem [thread:$0]  %s0, 128, %s17, [#allocation3], 64, 64, 4
    $region5: #{tpu_custom_call.1} parent=1 // pred_fallthru
      _
    // Predicated region
    $region6: #{tpu_custom_call.1} parent=1 // pred_check
      _
    $region7: #{tpu_custom_call.1} parent=1 // pred_check_branch
      %24 = sbr.rel (0) target = $region9
    $region8: #{tpu_custom_call.1} parent=1 // pred_region
      %s26 = ssub.s32 1024, 1024
      %27 = vsyncadd [#allocation6], %s26
      %s28 = sshll.u32 [#allocation5], 4
      %s29 = int_to_ptr.vmem [resolvable:$true] %s28
      %34 = dma.hbm_to_vmem [thread:$0]  %s1, 1024, %s29, [#allocation6], 64, 64, 4
    $region9: #{tpu_custom_call.1} parent=1 // pred_fallthru
      _
    // Predicated region
    $region10: #{tpu_custom_call.1} parent=1 // pred_check
      _
    $region11: #{tpu_custom_call.1} parent=1 // pred_check_branch
      %36 = sbr.rel (0) target = $region13
    $region12: #{tpu_custom_call.1} parent=1 // pred_region
      _
    $region13: #{tpu_custom_call.1} parent=1 // pred_fallthru
      _
    // Predicated region
    $region14: #{tpu_custom_call.1} parent=1 // pred_check
      _
    $region15: #{tpu_custom_call.1} parent=1 // pred_check_branch
      %38 = sbr.rel (0) target = $region17
    $region16: #{tpu_custom_call.1} parent=1 // pred_region
      %39 = dma.done [#allocation3], 128
    $region17: #{tpu_custom_call.1} parent=1 // pred_fallthru
      _
    // Predicated region
    $region18: #{tpu_custom_call.1} parent=1 // pred_check
      _
    $region19: #{tpu_custom_call.1} parent=1 // pred_check_branch
      %41 = sbr.rel (0) target = $region21
    $region20: #{tpu_custom_call.1} parent=1 // pred_region
      %42 = dma.done [#allocation6], 1024
    $region21: #{tpu_custom_call.1} parent=1 // pred_fallthru
      _
    %v44 = vld [vmem:[#allocation2] sm:$0xf]
    %v45 = vld [vmem:[#allocation2 + $0x4] sm:$0xf]
    %v46 = vld [vmem:[#allocation5] sm:$0xf]
    %v47 = vld [vmem:[#allocation5 + $0x4] sm:$0xf]
    %v48 = vld [vmem:[#allocation5 + $0x8] sm:$0xf]
    %v49 = vld [vmem:[#allocation5 + $0xc] sm:$0xf]
    %v50 = vld [vmem:[#allocation5 + $0x10] sm:$0xf]
    %v51 = vld [vmem:[#allocation5 + $0x14] sm:$0xf]
    %v52 = vld [vmem:[#allocation5 + $0x18] sm:$0xf]
    %v53 = vld [vmem:[#allocation5 + $0x1c] sm:$0xf]
    %v54 = vld [vmem:[#allocation5 + $0x20] sm:$0xf]
    %v55 = vld [vmem:[#allocation5 + $0x24] sm:$0xf]
    %v56 = vld [vmem:[#allocation5 + $0x28] sm:$0xf]
    %v57 = vld [vmem:[#allocation5 + $0x2c] sm:$0xf]
    %v58 = vld [vmem:[#allocation5 + $0x30] sm:$0xf]
    %v59 = vld [vmem:[#allocation5 + $0x34] sm:$0xf]
    %v60 = vld [vmem:[#allocation5 + $0x38] sm:$0xf]
    %v61 = vld [vmem:[#allocation5 + $0x3c] sm:$0xf]
    %v62 = vld [vmem:[%s2] sm:$0x1]
    %v64 = vlaneseq
    %v65 = vshrl.u32 %v64, 7
    %v66 = vsub.s32 0, %v65
    %v67 = vrot.slane %v62, %v66
    %v71 = vunpack.c.l.b16 %v44
    %v72 = vunpack.c.l.b16 %v45
    %v73 = vpack.c.b16 %v72, %v71
    %v91 = vunpack.c.l.b16 %v46
    %v92 = vunpack.c.l.b16 %v47
    %v93 = vunpack.c.l.b16 %v48
    %v94 = vunpack.c.l.b16 %v49
    %v95 = vunpack.c.l.b16 %v50
    %v96 = vunpack.c.l.b16 %v51
    %v97 = vunpack.c.l.b16 %v52
    %v98 = vunpack.c.l.b16 %v53
    %v99 = vunpack.c.l.b16 %v54
    %v100 = vunpack.c.l.b16 %v55
    %v101 = vunpack.c.l.b16 %v56
    %v102 = vunpack.c.l.b16 %v57
    %v103 = vunpack.c.l.b16 %v58
    %v104 = vunpack.c.l.b16 %v59
    %v105 = vunpack.c.l.b16 %v60
    %v106 = vunpack.c.l.b16 %v61
    %v107 = vpack.c.b16 %v92, %v91
    %v108 = vpack.c.b16 %v94, %v93
    %v109 = vpack.c.b16 %v96, %v95
    %v110 = vpack.c.b16 %v98, %v97
    %v111 = vpack.c.b16 %v100, %v99
    %v112 = vpack.c.b16 %v102, %v101
    %v113 = vpack.c.b16 %v104, %v103
    %v114 = vpack.c.b16 %v106, %v105
    %123 = vmatprep.subr.bf16.mxu0 0
    %124 = vmatpush1.bf16.msra.mxu0 %v114
    %125 = vmatprep.subr.bf16.mxu0 0
    %126 = vmatpush1.bf16.msra.mxu0 %v113
    %127 = vmatprep.subr.bf16.mxu0 0
    %128 = vmatpush1.bf16.msra.mxu0 %v112
    %129 = vmatprep.subr.bf16.mxu0 0
    %130 = vmatpush1.bf16.msra.mxu0 %v111
    %131 = vmatprep.subr.bf16.mxu0 0
    %132 = vmatpush1.bf16.msra.mxu0 %v110
    %133 = vmatprep.subr.bf16.mxu0 0
    %134 = vmatpush1.bf16.msra.mxu0 %v109
    %135 = vmatprep.subr.bf16.mxu0 0
    %136 = vmatpush1.bf16.msra.mxu0 %v108
    %137 = vmatprep.subr.bf16.mxu0 0
    %138 = vmatpush1.bf16.msra.mxu0 %v107
    %139 = vmatprep.subr.bf16.mxu0 0
    %140 = vmatpush2.bf16.msra.mxu0 0
    %141 = vmatprep.subr.bf16.mxu0 0
    %142 = vmatpush2.bf16.msra.mxu0 0
    %143 = vmatprep.subr.bf16.mxu0 0
    %144 = vmatpush2.bf16.msra.mxu0 0
    %145 = vmatprep.subr.bf16.mxu0 0
    %146 = vmatpush2.bf16.msra.mxu0 0
    %147 = vmatprep.subr.bf16.mxu0 0
    %148 = vmatpush2.bf16.msra.mxu0 0
    %149 = vmatprep.subr.bf16.mxu0 0
    %150 = vmatpush2.bf16.msra.mxu0 0
    %151 = vmatprep.subr.bf16.mxu0 0
    %152 = vmatpush2.bf16.msra.mxu0 0
    %153 = vmatprep.subr.bf16.mxu0 0
    %154 = vmatpush2.bf16.msra.mxu0 0
    %155 = vmatprep.mubr.bf16.mxu0 0
    %156 = vmatmul.mubr.bf16.gmra.mxu0 %v73
    %v157 = vpop.f32.mrf.mxu0
    %v158 = vadd.f32 %v67, %v157
    %v159 = vpop.f32.mrf.mxu0
    %v160 = vpop.f32.mrf.mxu0
    %v161 = vadd.f32 %v67, %v160
    %v162 = vpop.f32.mrf.mxu0
    %163 = vdwg.mxu0
    %164 = vst [vmem:[#allocation7] sm:$0xff] %v158
    %165 = vst [vmem:[#allocation7 + $0x8] sm:$0xff] %v161
    // Predicated region
    $region22: #{tpu_custom_call.1} parent=1 // pred_check
      _
    $region23: #{tpu_custom_call.1} parent=1 // pred_check_branch
      %167 = sbr.rel (0) target = $region25
    $region24: #{tpu_custom_call.1} parent=1 // pred_region
      %s169 = ssub.s32 256, 256
      %170 = vsyncadd [#allocation4], %s169
      %s171 = sshll.u32 [#allocation7], 4
      %s172 = int_to_ptr.vmem [resolvable:$true] %s171
      %177 = dma.vmem_to_hbm [thread:$0]  %s172, 256, %s3, [#allocation4], 128, 128, 8
    $region25: #{tpu_custom_call.1} parent=1 // pred_fallthru
      _
    // Predicated region
    $region26: #{tpu_custom_call.1} parent=1 // pred_check
      _
    $region27: #{tpu_custom_call.1} parent=1 // pred_check_branch
      %179 = sbr.rel (0) target = $region29
    $region28: #{tpu_custom_call.1} parent=1 // pred_region
      %180 = dma.done [#allocation4], 256
    $region29: #{tpu_custom_call.1} parent=1 // pred_fallthru
      _
    %181 = vsyncpa [#allocation3], 1
    %182 = vsyncpa [#allocation6], 1
    %183 = vsyncpa [#allocation4], 1

</llo_original>
